<compile_context>
chip_gen: v6e
topology: v6e:2x2x1
jax: 0.10.0
libtpu: 0.0.40
codegen_flags: <defaults>
</compile_context>

<pallas_src>
import jax
import jax.numpy as jnp
from jax.experimental import pallas as pl
from jax.experimental.pallas import tpu as pltpu


# ---------------------------------------------------------------------------
# Kernel: whole fused 3-layer MLP (all heads, biases folded), 2 inputs.
#   x_ref : (TB, P)      activations (with ones column at index D)
#   w_ref : (3, P, P)    packed fused weights (W1, W2, W3)
#   out   : (TB, P)      lane-dense output slab; real Q-values in [:, :H*A]
# ---------------------------------------------------------------------------
def _fused_mlp_kernel(x_ref, w_ref, out_ref):
    wdt = w_ref.dtype
    x = x_ref[...]
    h1 = jnp.maximum(
        jnp.dot(x, w_ref[0], preferred_element_type=jnp.float32), 0.0)
    h2 = jnp.maximum(
        jnp.dot(h1.astype(wdt), w_ref[1], preferred_element_type=jnp.float32), 0.0)
    y = jnp.dot(h2.astype(wdt), w_ref[2], preferred_element_type=jnp.float32)
    out_ref[...] = y.astype(out_ref.dtype)


def _round_up(n, m=128):
    return ((n + m - 1) // m) * m


# ---------------------------------------------------------------------------
# One-time layout plumbing: per-head (out, in) weights -> one packed (3, P, P)
# lane-padded, pre-transposed, block-diagonal, bias-folded weight buffer.
# ---------------------------------------------------------------------------
def fuse_params(params, *, dtype=jnp.float32):
    w1, b1 = params["w1"], params["b1"]     # (H,16,D), (H,16)
    w2, b2 = params["w2"], params["b2"]     # (H,16,16), (H,16)
    w3, b3 = params["w3"], params["b3"]     # (H,A,16), (H,A)
    H, hid, D = w1.shape
    A = w3.shape[1]

    # Common padded width: covers input(+ones col), hidden(+carrier col), output.
    P = _round_up(max(D + 1, H * hid + 1, H * A))
    carrier = P - 1                          # column that carries a constant 1.0

    # Layer 1: heads concatenated along output lanes, bias row at input index D.
    w1f = jnp.zeros((P, P), jnp.float32)
    for h in range(H):
        w1f = w1f.at[:D, h * hid:(h + 1) * hid].set(w1[h].T)
        w1f = w1f.at[D, h * hid:(h + 1) * hid].set(b1[h])
    w1f = w1f.at[D, carrier].set(1.0)        # keep the carrier alive

    # Layer 2: block-diagonal, bias folded into the carrier row.
    w2f = jnp.zeros((P, P), jnp.float32)
    for h in range(H):
        w2f = w2f.at[h * hid:(h + 1) * hid, h * hid:(h + 1) * hid].set(w2[h].T)
        w2f = w2f.at[carrier, h * hid:(h + 1) * hid].set(b2[h])
    w2f = w2f.at[carrier, carrier].set(1.0)  # keep the carrier alive

    # Layer 3: block-diagonal, bias folded into the carrier row.
    w3f = jnp.zeros((P, P), jnp.float32)
    for h in range(H):
        w3f = w3f.at[h * hid:(h + 1) * hid, h * A:(h + 1) * A].set(w3[h].T)
        w3f = w3f.at[carrier, h * A:(h + 1) * A].set(b3[h])

    w_packed = jnp.stack([w1f, w2f, w3f]).astype(dtype)   # (3, P, P)

    return {
        "w": w_packed,
        "nheads": H, "action_space": A, "input_dim": D, "pad": P,
    }


# ---------------------------------------------------------------------------
# Forward pass: returns a list (length nheads) of (B, action_space) arrays,
# matching the PyTorch module's forward().
# ---------------------------------------------------------------------------
def bootstrapped_dqn_forward(x, fused, *, batch_tile=256):
    B, D = x.shape
    H = fused["nheads"]
    A = fused["action_space"]
    P = fused["pad"]
    w = fused["w"]
    wdt = w.dtype
    assert D == fused["input_dim"]

    # Augment + lane-pad the input: columns [0:D]=x, [D]=1.0 (bias carrier).
    x_aug = jnp.zeros((B, P), jnp.float32)
    x_aug = x_aug.at[:, :D].set(x.astype(jnp.float32))
    x_aug = x_aug.at[:, D].set(1.0)
    x_aug = x_aug.astype(wdt)

    if B <= batch_tile:
        # Small batch: no grid, whole arrays resident in VMEM, one kernel body.
        out = pl.pallas_call(
            _fused_mlp_kernel,
            out_shape=jax.ShapeDtypeStruct((B, P), jnp.float32),
            in_specs=[
                pl.BlockSpec(memory_space=pltpu.MemorySpace.VMEM),   # x_aug
                pl.BlockSpec(memory_space=pltpu.MemorySpace.VMEM),   # packed W
            ],
            out_specs=pl.BlockSpec(memory_space=pltpu.MemorySpace.VMEM),
        )(x_aug, w)
    else:
        # Large batch: tile the batch axis; weights stay VMEM-resident across
        # steps; "parallel" lets the grid shard across v7x's 2 TensorCores.
        TB = batch_tile
        n_tiles = pl.cdiv(B, TB)
        B_pad = n_tiles * TB
        if B_pad != B:
            x_aug = jnp.pad(x_aug, ((0, B_pad - B), (0, 0)))
        out = pl.pallas_call(
            _fused_mlp_kernel,
            out_shape=jax.ShapeDtypeStruct((B_pad, P), jnp.float32),
            grid=(n_tiles,),
            in_specs=[
                pl.BlockSpec((TB, P), lambda i: (i, 0)),       # x tile
                pl.BlockSpec((3, P, P), lambda i: (0, 0, 0)),  # resident weights
            ],
            out_specs=pl.BlockSpec((TB, P), lambda i: (i, 0)),
            compiler_params=pltpu.CompilerParams(
                dimension_semantics=("parallel",)),
        )(x_aug, w)
        out = out[:B]

    # Strip lane padding once, split into per-head outputs (PyTorch semantics).
    q = out[:, :H * A]
    return list(jnp.split(q, H, axis=1))


# ---------------------------------------------------------------------------
# Deterministic synthetic init (uniform, PyTorch-Linear-like fan-in scale).
# ---------------------------------------------------------------------------
def init_params(key, nheads, input_dim, action_space):
    ks = jax.random.split(key, 6)

    def u(k, shape, fan_in):
        bound = 1.0 / jnp.sqrt(jnp.asarray(fan_in, jnp.float32))
        return jax.random.uniform(k, shape, jnp.float32, -bound, bound)

    return {
        "w1": u(ks[0], (nheads, 16, input_dim), input_dim),
        "b1": u(ks[1], (nheads, 16), input_dim),
        "w2": u(ks[2], (nheads, 16, 16), 16),
        "b2": u(ks[3], (nheads, 16), 16),
        "w3": u(ks[4], (nheads, action_space, 16), 16),
        "b3": u(ks[5], (nheads, action_space), 16),
    }


def reference_forward(x, params):
    outs = []
    for h in range(params["w1"].shape[0]):
        h1 = jnp.maximum(x @ params["w1"][h].T + params["b1"][h], 0.0)
        h2 = jnp.maximum(h1 @ params["w2"][h].T + params["b2"][h], 0.0)
        outs.append(h2 @ params["w3"][h].T + params["b3"][h])
    return outs


if __name__ == "__main__":
    key = jax.random.PRNGKey(0)
    nheads, input_dim, action_space = 3, 32, 4

    kx, kp, kx2 = jax.random.split(key, 3)
    params = init_params(kp, nheads, input_dim, action_space)

    # --- small batch: grid-less, fully-fused, lane-padded kernel (exact f32) ---
    batch = 2
    x = jax.random.normal(kx, (batch, input_dim), jnp.float32)
    fused_f32 = fuse_params(params, dtype=jnp.float32)
    outs = bootstrapped_dqn_forward(x, fused_f32)
    outs = [jax.block_until_ready(o) for o in outs]
    refs = reference_forward(x, params)
    for o, r in zip(outs, refs):
        assert o.shape == (batch, action_space)
        assert jnp.allclose(o, r, atol=1e-5, rtol=1e-5)

    # --- larger batch: batch-tiled grid ("parallel" across TensorCores),
    #     bf16 matmul inputs (MXU-native on v6e/v7x), f32 elementwise. ---
    batch2 = 512
    x2 = jax.random.normal(kx2, (batch2, input_dim), jnp.float32)
    fused_bf16 = fuse_params(params, dtype=jnp.bfloat16)
    outs2 = bootstrapped_dqn_forward(x2, fused_bf16, batch_tile=256)
    outs2 = [jax.block_until_ready(o) for o in outs2]
    refs2 = reference_forward(x2, params)
    for o, r in zip(outs2, refs2):
        assert o.shape == (batch2, action_space)
        assert jnp.allclose(o, r, atol=5e-2, rtol=5e-2)

    print("KERNEL_OK")
</pallas_src>

<mosaic_0001>
module attributes {stable_mosaic.version = 11 : i64} {
  func.func @_fused_mlp_kernel(%arg0: memref<2x128xf32, #tpu.memory_space<vmem>>, %arg1: memref<3x128x128xf32, #tpu.memory_space<vmem>>, %arg2: memref<2x128xf32, #tpu.memory_space<vmem>>) attributes {dimension_semantics = [], scalar_prefetch = 0 : i64, scratch_operands = 0 : i64, tpu.core_type = #tpu.core_type<tc>} {
    %c0 = arith.constant 0 : index
    %c0_0 = arith.constant 0 : index
    %0 = vector.load %arg0[%c0, %c0_0] : memref<2x128xf32, #tpu.memory_space<vmem>>, vector<2x128xf32>
    %c0_1 = arith.constant 0 : index
    %c0_2 = arith.constant 0 : index
    %c0_3 = arith.constant 0 : index
    %1 = vector.load %arg1[%c0_1, %c0_2, %c0_3] : memref<3x128x128xf32, #tpu.memory_space<vmem>>, vector<1x128x128xf32>
    %2 = vector.shape_cast %1 : vector<1x128x128xf32> to vector<128x128xf32>
    %cst = arith.constant dense<0.000000e+00> : vector<2x128xf32>
    %3 = tpu.matmul %0, %2, %cst {dimension_numbers = #tpu.dot_dimension_numbers<[1], [0], [0], [1], [0, 0, 1, 1], [], []>} : vector<2x128xf32>, vector<128x128xf32>, vector<2x128xf32> -> vector<2x128xf32>
    %cst_4 = arith.constant 0.000000e+00 : f32
    %4 = vector.broadcast %cst_4 : f32 to vector<2x128xf32>
    %5 = arith.maximumf %3, %4 : vector<2x128xf32>
    %c1 = arith.constant 1 : index
    %c0_5 = arith.constant 0 : index
    %c0_6 = arith.constant 0 : index
    %6 = vector.load %arg1[%c1, %c0_5, %c0_6] : memref<3x128x128xf32, #tpu.memory_space<vmem>>, vector<1x128x128xf32>
    %7 = vector.shape_cast %6 : vector<1x128x128xf32> to vector<128x128xf32>
    %cst_7 = arith.constant dense<0.000000e+00> : vector<2x128xf32>
    %8 = tpu.matmul %5, %7, %cst_7 {dimension_numbers = #tpu.dot_dimension_numbers<[1], [0], [0], [1], [0, 0, 1, 1], [], []>} : vector<2x128xf32>, vector<128x128xf32>, vector<2x128xf32> -> vector<2x128xf32>
    %cst_8 = arith.constant 0.000000e+00 : f32
    %9 = vector.broadcast %cst_8 : f32 to vector<2x128xf32>
    %10 = arith.maximumf %8, %9 : vector<2x128xf32>
    %c2 = arith.constant 2 : index
    %c0_9 = arith.constant 0 : index
    %c0_10 = arith.constant 0 : index
    %11 = vector.load %arg1[%c2, %c0_9, %c0_10] : memref<3x128x128xf32, #tpu.memory_space<vmem>>, vector<1x128x128xf32>
    %12 = vector.shape_cast %11 : vector<1x128x128xf32> to vector<128x128xf32>
    %cst_11 = arith.constant dense<0.000000e+00> : vector<2x128xf32>
    %13 = tpu.matmul %10, %12, %cst_11 {dimension_numbers = #tpu.dot_dimension_numbers<[1], [0], [0], [1], [0, 0, 1, 1], [], []>} : vector<2x128xf32>, vector<128x128xf32>, vector<2x128xf32> -> vector<2x128xf32>
    %c0_12 = arith.constant 0 : index
    %c0_13 = arith.constant 0 : index
    %14 = vector.load %arg2[%c0_12, %c0_13] : memref<2x128xf32, #tpu.memory_space<vmem>>, vector<2x128xf32>
    tpu.vector_store %arg2[%c0_12, %c0_13], %13 {strides = array<i32>} : memref<2x128xf32, #tpu.memory_space<vmem>>, vector<2x128xf32>,
    return
  }
}

</mosaic_0001>

<llo_original>
// kernel: tpu_custom_call.1
$region0: #{tpu_custom_call.1}
  #allocation0 [shape = 'u32[]', space=smem, size = 0x4, offset = 0x4, fixed_abs, tag = 'smem constant byte address 0x4 - core index']
  #allocation1 [shape = 'u32[144,128]{1,0:T(1,128)}', space=vmem, size = 0x12000, scoped, tag = 'internal scratch']
  %s0 = inlined_call_operand.hbm [shape: f32[2,128], index: 0, kind: input, shape index: {}]
  %s1 = inlined_call_operand.hbm [shape: f32[3,128,128], index: 1, kind: input, shape index: {}]
  %s2 = inlined_call_operand.hbm [shape: f32[2,128], index: 2, kind: output, shape index: {}]
  %s3 = sld [smem:[#allocation0]]
  $region26: #{tpu_custom_call.1} parent=0
    _
  %s5 = ssub.s32 1, %s3
  %s6 = scalar_select 0, %s5, %s3
  $region1: #{tpu_custom_call.1} parent=0
    #allocation2 [shape = 'u8[1024]{0}', space=vmem, size = 0x400, scoped, tag = 'input window, operand 0, single buffered']
    #allocation3 [shape = 's32[1]{0}', space=sflag, size = 0x4, scoped, tag = 'scoped memory for tpu_custom_call.1']
    #allocation4 [shape = 's32[1]{0}', space=sflag, size = 0x4, scoped, tag = 'scoped memory for tpu_custom_call.1']
    #allocation5 [shape = 'u8[196608]{0}', space=vmem, size = 0x30000, scoped, tag = 'input window, operand 1, single buffered']
    #allocation6 [shape = 's32[1]{0}', space=sflag, size = 0x4, scoped, tag = 'scoped memory for tpu_custom_call.1']
    #allocation7 [shape = 'u8[1024]{0}', space=vmem, size = 0x400, scoped, tag = 'output window, operand 0, single buffered']
    %7 = vsyncpa [#allocation3], 0
    %8 = vsyncpa [#allocation6], 0
    %9 = vsyncpa [#allocation4], 0
    // Predicated region
    $region2: #{tpu_custom_call.1} parent=1 // pred_check
      _
    $region3: #{tpu_custom_call.1} parent=1 // pred_check_branch
      %11 = sbr.rel (0) target = $region5
    $region4: #{tpu_custom_call.1} parent=1 // pred_region
      %s13 = ssub.s32 32, 32
      %14 = vsyncadd [#allocation3], %s13
      %s16 = sshll.u32 [#allocation2], 4
      %s17 = int_to_ptr.vmem [resolvable:$true] %s16
      %19 = dma.hbm_to_vmem [thread:$0]  %s0, 32, %s17, [#allocation3]
    $region5: #{tpu_custom_call.1} parent=1 // pred_fallthru
      _
    // Predicated region
    $region6: #{tpu_custom_call.1} parent=1 // pred_check
      _
    $region7: #{tpu_custom_call.1} parent=1 // pred_check_branch
      %21 = sbr.rel (0) target = $region9
    $region8: #{tpu_custom_call.1} parent=1 // pred_region
      %s23 = ssub.s32 6144, 6144
      %24 = vsyncadd [#allocation6], %s23
      %s25 = sshll.u32 [#allocation5], 4
      %s26 = int_to_ptr.vmem [resolvable:$true] %s25
      %31 = dma.hbm_to_vmem [thread:$0]  %s1, 6144, %s26, [#allocation6], 128, 128, 8
    $region9: #{tpu_custom_call.1} parent=1 // pred_fallthru
      _
    // Predicated region
    $region10: #{tpu_custom_call.1} parent=1 // pred_check
      _
    $region11: #{tpu_custom_call.1} parent=1 // pred_check_branch
      %33 = sbr.rel (0) target = $region13
    $region12: #{tpu_custom_call.1} parent=1 // pred_region
      %34 = dma.done [#allocation3], 32
    $region13: #{tpu_custom_call.1} parent=1 // pred_fallthru
      _
    // Predicated region
    $region14: #{tpu_custom_call.1} parent=1 // pred_check
      _
    $region15: #{tpu_custom_call.1} parent=1 // pred_check_branch
      %36 = sbr.rel (0) target = $region17
    $region16: #{tpu_custom_call.1} parent=1 // pred_region
      %37 = dma.done [#allocation6], 6144
    $region17: #{tpu_custom_call.1} parent=1 // pred_fallthru
      _
    %v38 = vld [vmem:[#allocation2] sm:$0x3]
    %v39 = vld [vmem:[#allocation5] sm:$0xff]
    %v40 = vld [vmem:[#allocation5 + $0x8] sm:$0xff]
    %v41 = vld [vmem:[#allocation5 + $0x10] sm:$0xff]
    %v42 = vld [vmem:[#allocation5 + $0x18] sm:$0xff]
    %v43 = vld [vmem:[#allocation5 + $0x20] sm:$0xff]
    %v44 = vld [vmem:[#allocation5 + $0x28] sm:$0xff]
    %v45 = vld [vmem:[#allocation5 + $0x30] sm:$0xff]
    %v46 = vld [vmem:[#allocation5 + $0x38] sm:$0xff]
    %v47 = vld [vmem:[#allocation5 + $0x40] sm:$0xff]
    %v48 = vld [vmem:[#allocation5 + $0x48] sm:$0xff]
    %v49 = vld [vmem:[#allocation5 + $0x50] sm:$0xff]
    %v50 = vld [vmem:[#allocation5 + $0x58] sm:$0xff]
    %v51 = vld [vmem:[#allocation5 + $0x60] sm:$0xff]
    %v52 = vld [vmem:[#allocation5 + $0x68] sm:$0xff]
    %v53 = vld [vmem:[#allocation5 + $0x70] sm:$0xff]
    %v54 = vld [vmem:[#allocation5 + $0x78] sm:$0xff]
    %55 = vmatprep.subr.mxu0 0.0
    %56 = vmatpush1.msra.mxu0 %v54
    %57 = vmatprep.subr.mxu0 0.0
    %58 = vmatpush1.msra.mxu0 %v53
    %59 = vmatprep.subr.mxu0 0.0
    %60 = vmatpush1.msra.mxu0 %v52
    %61 = vmatprep.subr.mxu0 0.0
    %62 = vmatpush1.msra.mxu0 %v51
    %63 = vmatprep.subr.mxu0 0.0
    %64 = vmatpush1.msra.mxu0 %v50
    %65 = vmatprep.subr.mxu0 0.0
    %66 = vmatpush1.msra.mxu0 %v49
    %67 = vmatprep.subr.mxu0 0.0
    %68 = vmatpush1.msra.mxu0 %v48
    %69 = vmatprep.subr.mxu0 0.0
    %70 = vmatpush1.msra.mxu0 %v47
    %71 = vmatprep.subr.mxu0 0.0
    %72 = vmatpush1.msra.mxu0 %v46
    %73 = vmatprep.subr.mxu0 0.0
    %74 = vmatpush1.msra.mxu0 %v45
    %75 = vmatprep.subr.mxu0 0.0
    %76 = vmatpush1.msra.mxu0 %v44
    %77 = vmatprep.subr.mxu0 0.0
    %78 = vmatpush1.msra.mxu0 %v43
    %79 = vmatprep.subr.mxu0 0.0
    %80 = vmatpush1.msra.mxu0 %v42
    %81 = vmatprep.subr.mxu0 0.0
    %82 = vmatpush1.msra.mxu0 %v41
    %83 = vmatprep.subr.mxu0 0.0
    %84 = vmatpush1.msra.mxu0 %v40
    %85 = vmatprep.subr.mxu0 0.0
    %86 = vmatpush1.msra.mxu0 %v39
    %87 = vmatprep.subr.mxu0 0.0
    %88 = vmatpush2.msra.mxu0 0.0
    %89 = vmatprep.subr.mxu0 0.0
    %90 = vmatpush2.msra.mxu0 0.0
    %91 = vmatprep.subr.mxu0 0.0
    %92 = vmatpush2.msra.mxu0 0.0
    %93 = vmatprep.subr.mxu0 0.0
    %94 = vmatpush2.msra.mxu0 0.0
    %95 = vmatprep.subr.mxu0 0.0
    %96 = vmatpush2.msra.mxu0 0.0
    %97 = vmatprep.subr.mxu0 0.0
    %98 = vmatpush2.msra.mxu0 0.0
    %99 = vmatprep.subr.mxu0 0.0
    %100 = vmatpush2.msra.mxu0 0.0
    %101 = vmatprep.subr.mxu0 0.0
    %102 = vmatpush2.msra.mxu0 0.0
    %103 = vmatprep.subr.mxu0 0.0
    %104 = vmatpush2.msra.mxu0 0.0
    %105 = vmatprep.subr.mxu0 0.0
    %106 = vmatpush2.msra.mxu0 0.0
    %107 = vmatprep.subr.mxu0 0.0
    %108 = vmatpush2.msra.mxu0 0.0
    %109 = vmatprep.subr.mxu0 0.0
    %110 = vmatpush2.msra.mxu0 0.0
    %111 = vmatprep.subr.mxu0 0.0
    %112 = vmatpush2.msra.mxu0 0.0
    %113 = vmatprep.subr.mxu0 0.0
    %114 = vmatpush2.msra.mxu0 0.0
    %115 = vmatprep.subr.mxu0 0.0
    %116 = vmatpush2.msra.mxu0 0.0
    %117 = vmatprep.subr.mxu0 0.0
    %118 = vmatpush2.msra.mxu0 0.0
    %119 = vmatprep.mubr.f32.mxu0 0.0
    %120 = vmatmul.mubr.f32.gmra.mxu0 %v38
    %v121 = vpop.f32.mrf.mxu0
    %v122 = vadd.f32 0.0, %v121
    %v123 = vpop.f32.mrf.mxu0
    %124 = vdwg.mxu0
    %v125 = vmax.f32 %v122, 0.0
    %s126 = scalar_lea.vmem [#allocation5], 128
    %v127 = vld [vmem:[%s126] sm:$0xff]
    %v128 = vld [vmem:[%s126 + $0x8] sm:$0xff]
    %v129 = vld [vmem:[%s126 + $0x10] sm:$0xff]
    %v130 = vld [vmem:[%s126 + $0x18] sm:$0xff]
    %v131 = vld [vmem:[%s126 + $0x20] sm:$0xff]
    %v132 = vld [vmem:[%s126 + $0x28] sm:$0xff]
    %v133 = vld [vmem:[%s126 + $0x30] sm:$0xff]
    %v134 = vld [vmem:[%s126 + $0x38] sm:$0xff]
    %v135 = vld [vmem:[%s126 + $0x40] sm:$0xff]
    %v136 = vld [vmem:[%s126 + $0x48] sm:$0xff]
    %v137 = vld [vmem:[%s126 + $0x50] sm:$0xff]
    %v138 = vld [vmem:[%s126 + $0x58] sm:$0xff]
    %v139 = vld [vmem:[%s126 + $0x60] sm:$0xff]
    %v140 = vld [vmem:[%s126 + $0x68] sm:$0xff]
    %v141 = vld [vmem:[%s126 + $0x70] sm:$0xff]
    %v142 = vld [vmem:[%s126 + $0x78] sm:$0xff]
    %143 = vmatprep.subr.mxu0 0.0
    %144 = vmatpush1.msra.mxu0 %v142
    %145 = vmatprep.subr.mxu0 0.0
    %146 = vmatpush1.msra.mxu0 %v141
    %147 = vmatprep.subr.mxu0 0.0
    %148 = vmatpush1.msra.mxu0 %v140
    %149 = vmatprep.subr.mxu0 0.0
    %150 = vmatpush1.msra.mxu0 %v139
    %151 = vmatprep.subr.mxu0 0.0
    %152 = vmatpush1.msra.mxu0 %v138
    %153 = vmatprep.subr.mxu0 0.0
    %154 = vmatpush1.msra.mxu0 %v137
    %155 = vmatprep.subr.mxu0 0.0
    %156 = vmatpush1.msra.mxu0 %v136
    %157 = vmatprep.subr.mxu0 0.0
    %158 = vmatpush1.msra.mxu0 %v135
    %159 = vmatprep.subr.mxu0 0.0
    %160 = vmatpush1.msra.mxu0 %v134
    %161 = vmatprep.subr.mxu0 0.0
    %162 = vmatpush1.msra.mxu0 %v133
    %163 = vmatprep.subr.mxu0 0.0
    %164 = vmatpush1.msra.mxu0 %v132
    %165 = vmatprep.subr.mxu0 0.0
    %166 = vmatpush1.msra.mxu0 %v131
    %167 = vmatprep.subr.mxu0 0.0
    %168 = vmatpush1.msra.mxu0 %v130
    %169 = vmatprep.subr.mxu0 0.0
    %170 = vmatpush1.msra.mxu0 %v129
    %171 = vmatprep.subr.mxu0 0.0
    %172 = vmatpush1.msra.mxu0 %v128
    %173 = vmatprep.subr.mxu0 0.0
    %174 = vmatpush1.msra.mxu0 %v127
    %175 = vmatprep.subr.mxu0 0.0
    %176 = vmatpush2.msra.mxu0 0.0
    %177 = vmatprep.subr.mxu0 0.0
    %178 = vmatpush2.msra.mxu0 0.0
    %179 = vmatprep.subr.mxu0 0.0
    %180 = vmatpush2.msra.mxu0 0.0
    %181 = vmatprep.subr.mxu0 0.0
    %182 = vmatpush2.msra.mxu0 0.0
    %183 = vmatprep.subr.mxu0 0.0
    %184 = vmatpush2.msra.mxu0 0.0
    %185 = vmatprep.subr.mxu0 0.0
    %186 = vmatpush2.msra.mxu0 0.0
    %187 = vmatprep.subr.mxu0 0.0
    %188 = vmatpush2.msra.mxu0 0.0
    %189 = vmatprep.subr.mxu0 0.0
    %190 = vmatpush2.msra.mxu0 0.0
    %191 = vmatprep.subr.mxu0 0.0
    %192 = vmatpush2.msra.mxu0 0.0
    %193 = vmatprep.subr.mxu0 0.0
    %194 = vmatpush2.msra.mxu0 0.0
    %195 = vmatprep.subr.mxu0 0.0
    %196 = vmatpush2.msra.mxu0 0.0
    %197 = vmatprep.subr.mxu0 0.0
    %198 = vmatpush2.msra.mxu0 0.0
    %199 = vmatprep.subr.mxu0 0.0
    %200 = vmatpush2.msra.mxu0 0.0
    %201 = vmatprep.subr.mxu0 0.0
    %202 = vmatpush2.msra.mxu0 0.0
    %203 = vmatprep.subr.mxu0 0.0
    %204 = vmatpush2.msra.mxu0 0.0
    %205 = vmatprep.subr.mxu0 0.0
    %206 = vmatpush2.msra.mxu0 0.0
    %207 = vmatprep.mubr.f32.mxu0 0.0
    %208 = vmatmul.mubr.f32.gmra.mxu0 %v125
    %v209 = vpop.f32.mrf.mxu0
    %v210 = vadd.f32 0.0, %v209
    %v211 = vpop.f32.mrf.mxu0
    %212 = vdwg.mxu0
    %v213 = vmax.f32 %v210, 0.0
    %s214 = scalar_lea.vmem [#allocation5], 256
    %v215 = vld [vmem:[%s214] sm:$0xff]
    %v216 = vld [vmem:[%s214 + $0x8] sm:$0xff]
    %v217 = vld [vmem:[%s214 + $0x10] sm:$0xff]
    %v218 = vld [vmem:[%s214 + $0x18] sm:$0xff]
    %v219 = vld [vmem:[%s214 + $0x20] sm:$0xff]
    %v220 = vld [vmem:[%s214 + $0x28] sm:$0xff]
    %v221 = vld [vmem:[%s214 + $0x30] sm:$0xff]
    %v222 = vld [vmem:[%s214 + $0x38] sm:$0xff]
    %v223 = vld [vmem:[%s214 + $0x40] sm:$0xff]
    %v224 = vld [vmem:[%s214 + $0x48] sm:$0xff]
    %v225 = vld [vmem:[%s214 + $0x50] sm:$0xff]
    %v226 = vld [vmem:[%s214 + $0x58] sm:$0xff]
    %v227 = vld [vmem:[%s214 + $0x60] sm:$0xff]
    %v228 = vld [vmem:[%s214 + $0x68] sm:$0xff]
    %v229 = vld [vmem:[%s214 + $0x70] sm:$0xff]
    %v230 = vld [vmem:[%s214 + $0x78] sm:$0xff]
    %231 = vmatprep.subr.mxu0 0.0
    %232 = vmatpush1.msra.mxu0 %v230
    %233 = vmatprep.subr.mxu0 0.0
    %234 = vmatpush1.msra.mxu0 %v229
    %235 = vmatprep.subr.mxu0 0.0
    %236 = vmatpush1.msra.mxu0 %v228
    %237 = vmatprep.subr.mxu0 0.0
    %238 = vmatpush1.msra.mxu0 %v227
    %239 = vmatprep.subr.mxu0 0.0
    %240 = vmatpush1.msra.mxu0 %v226
    %241 = vmatprep.subr.mxu0 0.0
    %242 = vmatpush1.msra.mxu0 %v225
    %243 = vmatprep.subr.mxu0 0.0
    %244 = vmatpush1.msra.mxu0 %v224
    %245 = vmatprep.subr.mxu0 0.0
    %246 = vmatpush1.msra.mxu0 %v223
    %247 = vmatprep.subr.mxu0 0.0
    %248 = vmatpush1.msra.mxu0 %v222
    %249 = vmatprep.subr.mxu0 0.0
    %250 = vmatpush1.msra.mxu0 %v221
    %251 = vmatprep.subr.mxu0 0.0
    %252 = vmatpush1.msra.mxu0 %v220
    %253 = vmatprep.subr.mxu0 0.0
    %254 = vmatpush1.msra.mxu0 %v219
    %255 = vmatprep.subr.mxu0 0.0
    %256 = vmatpush1.msra.mxu0 %v218
    %257 = vmatprep.subr.mxu0 0.0
    %258 = vmatpush1.msra.mxu0 %v217
    %259 = vmatprep.subr.mxu0 0.0
    %260 = vmatpush1.msra.mxu0 %v216
    %261 = vmatprep.subr.mxu0 0.0
    %262 = vmatpush1.msra.mxu0 %v215
    %263 = vmatprep.subr.mxu0 0.0
    %264 = vmatpush2.msra.mxu0 0.0
    %265 = vmatprep.subr.mxu0 0.0
    %266 = vmatpush2.msra.mxu0 0.0
    %267 = vmatprep.subr.mxu0 0.0
    %268 = vmatpush2.msra.mxu0 0.0
    %269 = vmatprep.subr.mxu0 0.0
    %270 = vmatpush2.msra.mxu0 0.0
    %271 = vmatprep.subr.mxu0 0.0
    %272 = vmatpush2.msra.mxu0 0.0
    %273 = vmatprep.subr.mxu0 0.0
    %274 = vmatpush2.msra.mxu0 0.0
    %275 = vmatprep.subr.mxu0 0.0
    %276 = vmatpush2.msra.mxu0 0.0
    %277 = vmatprep.subr.mxu0 0.0
    %278 = vmatpush2.msra.mxu0 0.0
    %279 = vmatprep.subr.mxu0 0.0
    %280 = vmatpush2.msra.mxu0 0.0
    %281 = vmatprep.subr.mxu0 0.0
    %282 = vmatpush2.msra.mxu0 0.0
    %283 = vmatprep.subr.mxu0 0.0
    %284 = vmatpush2.msra.mxu0 0.0
    %285 = vmatprep.subr.mxu0 0.0
    %286 = vmatpush2.msra.mxu0 0.0
    %287 = vmatprep.subr.mxu0 0.0
    %288 = vmatpush2.msra.mxu0 0.0
    %289 = vmatprep.subr.mxu0 0.0
    %290 = vmatpush2.msra.mxu0 0.0
    %291 = vmatprep.subr.mxu0 0.0
    %292 = vmatpush2.msra.mxu0 0.0
    %293 = vmatprep.subr.mxu0 0.0
    %294 = vmatpush2.msra.mxu0 0.0
    %295 = vmatprep.mubr.f32.mxu0 0.0
    %296 = vmatmul.mubr.f32.gmra.mxu0 %v213
    %v297 = vpop.f32.mrf.mxu0
    %v298 = vadd.f32 0.0, %v297
    %v299 = vpop.f32.mrf.mxu0
    %300 = vdwg.mxu0
    %301 = vst [vmem:[#allocation7] sm:$0x3] %v298
    // Predicated region
    $region18: #{tpu_custom_call.1} parent=1 // pred_check
      _
    $region19: #{tpu_custom_call.1} parent=1 // pred_check_branch
      %303 = sbr.rel (0) target = $region21
    $region20: #{tpu_custom_call.1} parent=1 // pred_region
      %s305 = ssub.s32 32, 32
      %306 = vsyncadd [#allocation4], %s305
      %s308 = sshll.u32 [#allocation7], 4
      %s309 = int_to_ptr.vmem [resolvable:$true] %s308
      %311 = dma.vmem_to_hbm [thread:$0]  %s309, 32, %s2, [#allocation4]
    $region21: #{tpu_custom_call.1} parent=1 // pred_fallthru
      _
    // Predicated region
    $region22: #{tpu_custom_call.1} parent=1 // pred_check
      _
    $region23: #{tpu_custom_call.1} parent=1 // pred_check_branch
      %313 = sbr.rel (0) target = $region25
    $region24: #{tpu_custom_call.1} parent=1 // pred_region
      %314 = dma.done [#allocation4], 32
    $region25: #{tpu_custom_call.1} parent=1 // pred_fallthru
      _
    %315 = vsyncpa [#allocation3], 1
    %316 = vsyncpa [#allocation6], 1
    %317 = vsyncpa [#allocation4], 1

</llo_original>
